<compile_context>
chip_gen: v5e
topology: v5e:2x2
jax: 0.10.0
libtpu: 0.0.40
codegen_flags: <defaults>
</compile_context>

<pallas_src>
import jax
import jax.numpy as jnp
from jax.experimental import pallas as pl
from jax.experimental.pallas import tpu as pltpu


# ----------------------------- config ---------------------------------------
B = 2            # batch
S = 8            # sequence length
D = 32           # hidden dim
H = 4            # query heads
G = 2            # kv heads (groups)
DH = D // H      # head dim = 8
SCALE = DH ** -0.5
HPG = H // G                      # query heads per kv group
QKV_N = H * DH + 2 * G * DH       # fused projection width = 64
K_OFF = H * DH                    # 32
V_OFF = H * DH + G * DH           # 48
NEG_INF = -1e30
D_PAD = 128                       # lane-dense output width (>= D, multiple of 128)
T = B * S                         # total tokens per kernel invocation


# ----------------------------- kernel ---------------------------------------
def mgqa_kernel(x_ref, bias_ref, wqkv_ref, wo_ref, o_ref, cat_ref):
    # x_ref:    (T, D)        bf16 tokens (all batch elements, flattened)
    # bias_ref: (B, 1, S)     f32 additive key-padding bias (0 attend / -1e30 masked)
    # wqkv_ref: (D, QKV_N)    bf16  [Wq | Wk | Wv]
    # wo_ref:   (H*DH, D_PAD) bf16  (zero-padded output columns -> lane-dense store)
    # o_ref:    (T, D_PAD)    f32 output
    # cat_ref:  (T, H*DH)     f32 VMEM scratch holding concatenated head outputs

    # Single fused QKV projection (one bf16 MXU matmul, f32 accumulation).
    qkv = jnp.dot(x_ref[...], wqkv_ref[...],
                  preferred_element_type=jnp.float32)           # (T, QKV_N) f32

    for b in range(B):                          # static unroll over batch
        rows = slice(b * S, (b + 1) * S)        # sublane-aligned row window
        # Hoisted: one (S, S) bias broadcast per batch element, reused by all heads.
        bias_bc = jnp.broadcast_to(bias_ref[b], (S, S))          # f32
        for g in range(G):                      # kv groups
            k = qkv[rows, K_OFF + g * DH:K_OFF + (g + 1) * DH]   # (S, DH) f32
            v = qkv[rows, V_OFF + g * DH:V_OFF + (g + 1) * DH]   # (S, DH) f32
            kt = k.astype(jnp.bfloat16).T       # one transpose + cast per group
            v16 = v.astype(jnp.bfloat16)        # cast hoisted out of the head loop
            for hh in range(HPG):
                h = g * HPG + hh                # query head using this kv group
                q = qkv[rows, h * DH:(h + 1) * DH].astype(jnp.bfloat16)  # (S, DH)
                # bf16 MXU score matmul, f32 accumulate; scale + additive mask in f32.
                s = jnp.dot(q, kt, preferred_element_type=jnp.float32) * SCALE + bias_bc
                # f32 softmax with exact normalisation (no approx reciprocal).
                m = jnp.max(s, axis=-1, keepdims=True)
                p = jnp.exp(s - m)
                attn = p * (1.0 / jnp.sum(p, axis=-1, keepdims=True))
                # Head output lands directly in its scratch columns (no concat chain).
                cat_ref[rows, h * DH:(h + 1) * DH] = jnp.dot(
                    attn.astype(jnp.bfloat16), v16,
                    preferred_element_type=jnp.float32)          # (S, DH) f32

    # Single output projection for all tokens; lane-dense (T, 128) store.
    out = jnp.dot(cat_ref[...].astype(jnp.bfloat16), wo_ref[...],
                  preferred_element_type=jnp.float32)            # (T, D_PAD)
    o_ref[...] = out


def mgqa_attention(x, key_mask, wq, wk, wv, wo):
    """x: (B, S, D) f32, key_mask: (B, S) bool -> (B, S, D) f32."""
    x2 = x.reshape(T, D).astype(jnp.bfloat16)
    # Additive key-padding bias: compare/select hoisted out of the kernel.
    bias = jnp.where(key_mask, 0.0, NEG_INF).astype(jnp.float32).reshape(B, 1, S)
    # Fused projection weight (bf16 MXU operand). Scale is NOT folded in (bf16 rounding).
    w_qkv = jnp.concatenate([wq, wk, wv], axis=1).astype(jnp.bfloat16)   # (D, QKV_N)
    # Zero-pad Wo's output dim to 128 -> lane-dense output stores; free MXU columns.
    wo_pad = jnp.pad(wo, ((0, 0), (0, D_PAD - D))).astype(jnp.bfloat16)  # (H*DH, D_PAD)

    out = pl.pallas_call(
        mgqa_kernel,
        out_shape=jax.ShapeDtypeStruct((T, D_PAD), jnp.float32),
        grid_spec=pltpu.PrefetchScalarGridSpec(
            num_scalar_prefetch=0,
            grid=(1,),                                            # single step; no TC split
            in_specs=[
                pl.BlockSpec((T, D), lambda i: (0, 0)),           # tokens (bf16)
                pl.BlockSpec((B, 1, S), lambda i: (0, 0, 0)),     # mask bias (f32)
                pl.BlockSpec((D, QKV_N), lambda i: (0, 0)),       # W_qkv (resident)
                pl.BlockSpec((H * DH, D_PAD), lambda i: (0, 0)),  # W_o   (resident)
            ],
            out_specs=pl.BlockSpec((T, D_PAD), lambda i: (0, 0)),
            scratch_shapes=[pltpu.VMEM((T, H * DH), jnp.float32)],
        ),
        compiler_params=pltpu.CompilerParams(
            dimension_semantics=("arbitrary",)),
    )(x2, bias, w_qkv, wo_pad)
    return out[:, :D].reshape(B, S, D)


# ----------------------- wrapper (mirrors MGQAWrapper.forward) ---------------
def mgqa_wrapper_forward(params, hidden_states, attention_mask=None,
                         encoder_hidden_states=None):
    # Derive the key padding mask exactly like MGQAWrapper.forward.
    if attention_mask is None:
        input_mask = jnp.ones(hidden_states.shape[:-1], dtype=bool)
    elif attention_mask.ndim == 4:
        input_mask = attention_mask[:, 0, 0, :].astype(bool)
    elif attention_mask.ndim == 2:
        input_mask = attention_mask.astype(bool)
    else:
        raise ValueError(f"Unexpected attention_mask shape: {attention_mask.shape}")

    if encoder_hidden_states is not None:
        # TODO(synk): cross-attention path of MGQA not implemented in this kernel.
        raise NotImplementedError("cross-attention path not implemented")

    out = mgqa_attention(hidden_states, input_mask,
                         params["wq"], params["wk"], params["wv"], params["wo"])
    return (out, None, None)


# ----------------------- pure-JAX reference (for sanity) ---------------------
def mgqa_reference(x, key_mask, wq, wk, wv, wo, mm_dtype=jnp.float32):
    """Reference MGQA. mm_dtype=bf16 reproduces the kernel's MXU operand casts
    (f32 accumulation, f32 softmax); mm_dtype=f32 is the exact-f32 semantics."""
    highest = jax.lax.Precision.HIGHEST if mm_dtype is jnp.float32 else None

    def mm(a, b):
        return jnp.dot(a.astype(mm_dtype), b.astype(mm_dtype),
                       preferred_element_type=jnp.float32, precision=highest)

    xb = x.reshape(B * S, D)
    q = mm(xb, wq).reshape(B, S, H, DH).transpose(0, 2, 1, 3)    # (B, H, S, DH)
    k = mm(xb, wk).reshape(B, S, G, DH).transpose(0, 2, 1, 3)    # (B, G, S, DH)
    v = mm(xb, wv).reshape(B, S, G, DH).transpose(0, 2, 1, 3)
    k = jnp.repeat(k, HPG, axis=1)                               # (B, H, S, DH)
    v = jnp.repeat(v, HPG, axis=1)
    scores = jnp.einsum("bhqd,bhkd->bhqk", q.astype(mm_dtype), k.astype(mm_dtype),
                        preferred_element_type=jnp.float32, precision=highest) * SCALE
    scores = jnp.where(key_mask[:, None, None, :], scores, NEG_INF)
    attn = jax.nn.softmax(scores, axis=-1)                       # f32 softmax
    o = jnp.einsum("bhqk,bhkd->bhqd", attn.astype(mm_dtype), v.astype(mm_dtype),
                   preferred_element_type=jnp.float32, precision=highest)
    o = o.transpose(0, 2, 1, 3).reshape(B * S, H * DH)
    return mm(o, wo).reshape(B, S, D)


def _check(out, hidden_states, key_mask, params):
    # Primary check: reference with the SAME bf16 MXU-operand rounding as the kernel.
    ref_bf16 = mgqa_reference(hidden_states, key_mask,
                              params["wq"], params["wk"], params["wv"], params["wo"],
                              mm_dtype=jnp.bfloat16)
    assert jnp.allclose(out, ref_bf16, rtol=1e-2, atol=1e-2), "mismatch vs bf16-matched ref"
    # Secondary check: exact-f32 semantics, loose tolerance for bf16 MXU operands.
    ref_f32 = mgqa_reference(hidden_states, key_mask,
                             params["wq"], params["wk"], params["wv"], params["wo"],
                             mm_dtype=jnp.float32)
    assert jnp.allclose(out, ref_f32, rtol=5e-2, atol=5e-2), "mismatch vs f32 ref"


# ---------------------------------- main -------------------------------------
if __name__ == "__main__":
    key = jax.random.PRNGKey(0)
    kx, kq, kk, kv, ko = jax.random.split(key, 5)

    hidden_states = jax.random.normal(kx, (B, S, D), dtype=jnp.float32)

    # deterministic parameter init (bias-free linears, as in MGQA)
    params = {
        "wq": jax.random.normal(kq, (D, H * DH), dtype=jnp.float32) * (D ** -0.5),
        "wk": jax.random.normal(kk, (D, G * DH), dtype=jnp.float32) * (D ** -0.5),
        "wv": jax.random.normal(kv, (D, G * DH), dtype=jnp.float32) * (D ** -0.5),
        "wo": jax.random.normal(ko, (H * DH, D), dtype=jnp.float32) * ((H * DH) ** -0.5),
    }

    # 1) attention_mask=None path (MGQAWrapper default)
    out, _, _ = mgqa_wrapper_forward(params, hidden_states, attention_mask=None)
    out = jax.block_until_ready(out)
    assert out.shape == (B, S, D)
    _check(out, hidden_states, jnp.ones((B, S), dtype=bool), params)

    # 2) 2-D attention_mask path with real key padding
    attn_mask_2d = jnp.ones((B, S), dtype=jnp.float32).at[1, S - 2:].set(0.0)
    out2, _, _ = mgqa_wrapper_forward(params, hidden_states,
                                      attention_mask=attn_mask_2d)
    out2 = jax.block_until_ready(out2)
    _check(out2, hidden_states, attn_mask_2d.astype(bool), params)

    print("KERNEL_OK")
</pallas_src>

<mosaic_0001>
module attributes {stable_mosaic.version = 11 : i64} {
  func.func @mgqa_kernel(%arg0: i32, %arg1: memref<16x32xbf16, #tpu.memory_space<vmem>>, %arg2: memref<2x1x8xf32, #tpu.memory_space<vmem>>, %arg3: memref<32x64xbf16, #tpu.memory_space<vmem>>, %arg4: memref<32x128xbf16, #tpu.memory_space<vmem>>, %arg5: memref<16x128xf32, #tpu.memory_space<vmem>>, %arg6: memref<16x32xf32, #tpu.memory_space<vmem>>) attributes {dimension_semantics = [#tpu.dimension_semantics<arbitrary>], iteration_bounds = array<i64: 1>, scalar_prefetch = 0 : i64, scratch_operands = 1 : i64, tpu.core_type = #tpu.core_type<tc>, window_params = [{pipeline_mode = #tpu.pipeline_mode<synchronous>, transform_indices = @transform_0, window_bounds = array<i64: 16, 32>}, {pipeline_mode = #tpu.pipeline_mode<synchronous>, transform_indices = @transform_1, window_bounds = array<i64: 2, 1, 8>}, {pipeline_mode = #tpu.pipeline_mode<synchronous>, transform_indices = @transform_2, window_bounds = array<i64: 32, 64>}, {pipeline_mode = #tpu.pipeline_mode<synchronous>, transform_indices = @transform_3, window_bounds = array<i64: 32, 128>}, {pipeline_mode = #tpu.pipeline_mode<synchronous>, transform_indices = @transform_4, window_bounds = array<i64: 16, 128>}]} {
    %c0 = arith.constant 0 : index
    %c0_0 = arith.constant 0 : index
    %0 = vector.load %arg1[%c0, %c0_0] : memref<16x32xbf16, #tpu.memory_space<vmem>>, vector<16x32xbf16>
    %c0_1 = arith.constant 0 : index
    %c0_2 = arith.constant 0 : index
    %1 = vector.load %arg3[%c0_1, %c0_2] : memref<32x64xbf16, #tpu.memory_space<vmem>>, vector<32x64xbf16>
    %cst = arith.constant dense<0.000000e+00> : vector<16x64xf32>
    %2 = tpu.matmul %0, %1, %cst {dimension_numbers = #tpu.dot_dimension_numbers<[1], [0], [0], [1], [0, 0, 1, 1], [], []>} : vector<16x32xbf16>, vector<32x64xbf16>, vector<16x64xf32> -> vector<16x64xf32>
    %c0_3 = arith.constant 0 : index
    %c0_4 = arith.constant 0 : index
    %c0_5 = arith.constant 0 : index
    %3 = vector.load %arg2[%c0_3, %c0_4, %c0_5] : memref<2x1x8xf32, #tpu.memory_space<vmem>>, vector<1x1x8xf32>
    %4 = vector.shape_cast %3 : vector<1x1x8xf32> to vector<1x8xf32>
    %5 = vector.shape_cast %4 : vector<1x8xf32> to vector<1x8xf32>
    %6 = vector.broadcast %5 : vector<1x8xf32> to vector<8x8xf32>
    %7 = vector.extract_strided_slice %2 {offsets = [0, 32], sizes = [8, 8], strides = [1, 1]} : vector<16x64xf32> to vector<8x8xf32>
    %8 = vector.extract_strided_slice %2 {offsets = [0, 48], sizes = [8, 8], strides = [1, 1]} : vector<16x64xf32> to vector<8x8xf32>
    %9 = arith.truncf %7 : vector<8x8xf32> to vector<8x8xbf16>
    %10 = tpu.transpose %9, [1, 0] : vector<8x8xbf16> -> vector<8x8xbf16>
    %11 = arith.truncf %8 : vector<8x8xf32> to vector<8x8xbf16>
    %12 = vector.extract_strided_slice %2 {offsets = [0, 0], sizes = [8, 8], strides = [1, 1]} : vector<16x64xf32> to vector<8x8xf32>
    %13 = arith.truncf %12 : vector<8x8xf32> to vector<8x8xbf16>
    %cst_6 = arith.constant dense<0.000000e+00> : vector<8x8xf32>
    %14 = tpu.matmul %13, %10, %cst_6 {dimension_numbers = #tpu.dot_dimension_numbers<[1], [0], [0], [1], [0, 0, 1, 1], [], []>} : vector<8x8xbf16>, vector<8x8xbf16>, vector<8x8xf32> -> vector<8x8xf32>
    %cst_7 = arith.constant 0.353553385 : f32
    %15 = vector.broadcast %cst_7 : f32 to vector<8x8xf32>
    %16 = arith.mulf %14, %15 : vector<8x8xf32>
    %17 = arith.addf %16, %6 : vector<8x8xf32>
    %cst_8 = arith.constant dense<0xFF800000> : vector<8xf32>
    %18 = vector.multi_reduction <maximumf>, %17, %cst_8 [1] : vector<8x8xf32> to vector<8xf32>
    %19 = vector.shape_cast %18 : vector<8xf32> to vector<8x1xf32>
    %20 = vector.broadcast %19 : vector<8x1xf32> to vector<8x8xf32>
    %21 = arith.subf %17, %20 : vector<8x8xf32>
    %22 = math.exp %21 : vector<8x8xf32>
    %cst_9 = arith.constant dense<0.000000e+00> : vector<8xf32>
    %23 = vector.multi_reduction <add>, %22, %cst_9 [1] : vector<8x8xf32> to vector<8xf32>
    %24 = vector.shape_cast %23 : vector<8xf32> to vector<8x1xf32>
    %cst_10 = arith.constant 1.000000e+00 : f32
    %25 = vector.broadcast %cst_10 : f32 to vector<8x1xf32>
    %26 = arith.divf %25, %24 : vector<8x1xf32>
    %27 = vector.broadcast %26 : vector<8x1xf32> to vector<8x8xf32>
    %28 = arith.mulf %22, %27 : vector<8x8xf32>
    %29 = arith.truncf %28 : vector<8x8xf32> to vector<8x8xbf16>
    %cst_11 = arith.constant dense<0.000000e+00> : vector<8x8xf32>
    %30 = tpu.matmul %29, %11, %cst_11 {dimension_numbers = #tpu.dot_dimension_numbers<[1], [0], [0], [1], [0, 0, 1, 1], [], []>} : vector<8x8xbf16>, vector<8x8xbf16>, vector<8x8xf32> -> vector<8x8xf32>
    %c0_12 = arith.constant 0 : index
    %c0_13 = arith.constant 0 : index
    %31 = vector.load %arg6[%c0_12, %c0_13] : memref<16x32xf32, #tpu.memory_space<vmem>>, vector<8x8xf32>
    tpu.vector_store %arg6[%c0_12, %c0_13], %30 {strides = array<i32>} : memref<16x32xf32, #tpu.memory_space<vmem>>, vector<8x8xf32>,
    %32 = vector.extract_strided_slice %2 {offsets = [0, 8], sizes = [8, 8], strides = [1, 1]} : vector<16x64xf32> to vector<8x8xf32>
    %33 = arith.truncf %32 : vector<8x8xf32> to vector<8x8xbf16>
    %cst_14 = arith.constant dense<0.000000e+00> : vector<8x8xf32>
    %34 = tpu.matmul %33, %10, %cst_14 {dimension_numbers = #tpu.dot_dimension_numbers<[1], [0], [0], [1], [0, 0, 1, 1], [], []>} : vector<8x8xbf16>, vector<8x8xbf16>, vector<8x8xf32> -> vector<8x8xf32>
    %cst_15 = arith.constant 0.353553385 : f32
    %35 = vector.broadcast %cst_15 : f32 to vector<8x8xf32>
    %36 = arith.mulf %34, %35 : vector<8x8xf32>
    %37 = arith.addf %36, %6 : vector<8x8xf32>
    %cst_16 = arith.constant dense<0xFF800000> : vector<8xf32>
    %38 = vector.multi_reduction <maximumf>, %37, %cst_16 [1] : vector<8x8xf32> to vector<8xf32>
    %39 = vector.shape_cast %38 : vector<8xf32> to vector<8x1xf32>
    %40 = vector.broadcast %39 : vector<8x1xf32> to vector<8x8xf32>
    %41 = arith.subf %37, %40 : vector<8x8xf32>
    %42 = math.exp %41 : vector<8x8xf32>
    %cst_17 = arith.constant dense<0.000000e+00> : vector<8xf32>
    %43 = vector.multi_reduction <add>, %42, %cst_17 [1] : vector<8x8xf32> to vector<8xf32>
    %44 = vector.shape_cast %43 : vector<8xf32> to vector<8x1xf32>
    %cst_18 = arith.constant 1.000000e+00 : f32
    %45 = vector.broadcast %cst_18 : f32 to vector<8x1xf32>
    %46 = arith.divf %45, %44 : vector<8x1xf32>
    %47 = vector.broadcast %46 : vector<8x1xf32> to vector<8x8xf32>
    %48 = arith.mulf %42, %47 : vector<8x8xf32>
    %49 = arith.truncf %48 : vector<8x8xf32> to vector<8x8xbf16>
    %cst_19 = arith.constant dense<0.000000e+00> : vector<8x8xf32>
    %50 = tpu.matmul %49, %11, %cst_19 {dimension_numbers = #tpu.dot_dimension_numbers<[1], [0], [0], [1], [0, 0, 1, 1], [], []>} : vector<8x8xbf16>, vector<8x8xbf16>, vector<8x8xf32> -> vector<8x8xf32>
    %c0_20 = arith.constant 0 : index
    %c8 = arith.constant 8 : index
    %51 = vector.load %arg6[%c0_20, %c8] : memref<16x32xf32, #tpu.memory_space<vmem>>, vector<8x8xf32>
    tpu.vector_store %arg6[%c0_20, %c8], %50 {strides = array<i32>} : memref<16x32xf32, #tpu.memory_space<vmem>>, vector<8x8xf32>,
    %52 = vector.extract_strided_slice %2 {offsets = [0, 40], sizes = [8, 8], strides = [1, 1]} : vector<16x64xf32> to vector<8x8xf32>
    %53 = vector.extract_strided_slice %2 {offsets = [0, 56], sizes = [8, 8], strides = [1, 1]} : vector<16x64xf32> to vector<8x8xf32>
    %54 = arith.truncf %52 : vector<8x8xf32> to vector<8x8xbf16>
    %55 = tpu.transpose %54, [1, 0] : vector<8x8xbf16> -> vector<8x8xbf16>
    %56 = arith.truncf %53 : vector<8x8xf32> to vector<8x8xbf16>
    %57 = vector.extract_strided_slice %2 {offsets = [0, 16], sizes = [8, 8], strides = [1, 1]} : vector<16x64xf32> to vector<8x8xf32>
    %58 = arith.truncf %57 : vector<8x8xf32> to vector<8x8xbf16>
    %cst_21 = arith.constant dense<0.000000e+00> : vector<8x8xf32>
    %59 = tpu.matmul %58, %55, %cst_21 {dimension_numbers = #tpu.dot_dimension_numbers<[1], [0], [0], [1], [0, 0, 1, 1], [], []>} : vector<8x8xbf16>, vector<8x8xbf16>, vector<8x8xf32> -> vector<8x8xf32>
    %cst_22 = arith.constant 0.353553385 : f32
    %60 = vector.broadcast %cst_22 : f32 to vector<8x8xf32>
    %61 = arith.mulf %59, %60 : vector<8x8xf32>
    %62 = arith.addf %61, %6 : vector<8x8xf32>
    %cst_23 = arith.constant dense<0xFF800000> : vector<8xf32>
    %63 = vector.multi_reduction <maximumf>, %62, %cst_23 [1] : vector<8x8xf32> to vector<8xf32>
    %64 = vector.shape_cast %63 : vector<8xf32> to vector<8x1xf32>
    %65 = vector.broadcast %64 : vector<8x1xf32> to vector<8x8xf32>
    %66 = arith.subf %62, %65 : vector<8x8xf32>
    %67 = math.exp %66 : vector<8x8xf32>
    %cst_24 = arith.constant dense<0.000000e+00> : vector<8xf32>
    %68 = vector.multi_reduction <add>, %67, %cst_24 [1] : vector<8x8xf32> to vector<8xf32>
    %69 = vector.shape_cast %68 : vector<8xf32> to vector<8x1xf32>
    %cst_25 = arith.constant 1.000000e+00 : f32
    %70 = vector.broadcast %cst_25 : f32 to vector<8x1xf32>
    %71 = arith.divf %70, %69 : vector<8x1xf32>
    %72 = vector.broadcast %71 : vector<8x1xf32> to vector<8x8xf32>
    %73 = arith.mulf %67, %72 : vector<8x8xf32>
    %74 = arith.truncf %73 : vector<8x8xf32> to vector<8x8xbf16>
    %cst_26 = arith.constant dense<0.000000e+00> : vector<8x8xf32>
    %75 = tpu.matmul %74, %56, %cst_26 {dimension_numbers = #tpu.dot_dimension_numbers<[1], [0], [0], [1], [0, 0, 1, 1], [], []>} : vector<8x8xbf16>, vector<8x8xbf16>, vector<8x8xf32> -> vector<8x8xf32>
    %c0_27 = arith.constant 0 : index
    %c16 = arith.constant 16 : index
    %76 = vector.load %arg6[%c0_27, %c16] : memref<16x32xf32, #tpu.memory_space<vmem>>, vector<8x8xf32>
    tpu.vector_store %arg6[%c0_27, %c16], %75 {strides = array<i32>} : memref<16x32xf32, #tpu.memory_space<vmem>>, vector<8x8xf32>,
    %77 = vector.extract_strided_slice %2 {offsets = [0, 24], sizes = [8, 8], strides = [1, 1]} : vector<16x64xf32> to vector<8x8xf32>
    %78 = arith.truncf %77 : vector<8x8xf32> to vector<8x8xbf16>
    %cst_28 = arith.constant dense<0.000000e+00> : vector<8x8xf32>
    %79 = tpu.matmul %78, %55, %cst_28 {dimension_numbers = #tpu.dot_dimension_numbers<[1], [0], [0], [1], [0, 0, 1, 1], [], []>} : vector<8x8xbf16>, vector<8x8xbf16>, vector<8x8xf32> -> vector<8x8xf32>
    %cst_29 = arith.constant 0.353553385 : f32
    %80 = vector.broadcast %cst_29 : f32 to vector<8x8xf32>
    %81 = arith.mulf %79, %80 : vector<8x8xf32>
    %82 = arith.addf %81, %6 : vector<8x8xf32>
    %cst_30 = arith.constant dense<0xFF800000> : vector<8xf32>
    %83 = vector.multi_reduction <maximumf>, %82, %cst_30 [1] : vector<8x8xf32> to vector<8xf32>
    %84 = vector.shape_cast %83 : vector<8xf32> to vector<8x1xf32>
    %85 = vector.broadcast %84 : vector<8x1xf32> to vector<8x8xf32>
    %86 = arith.subf %82, %85 : vector<8x8xf32>
    %87 = math.exp %86 : vector<8x8xf32>
    %cst_31 = arith.constant dense<0.000000e+00> : vector<8xf32>
    %88 = vector.multi_reduction <add>, %87, %cst_31 [1] : vector<8x8xf32> to vector<8xf32>
    %89 = vector.shape_cast %88 : vector<8xf32> to vector<8x1xf32>
    %cst_32 = arith.constant 1.000000e+00 : f32
    %90 = vector.broadcast %cst_32 : f32 to vector<8x1xf32>
    %91 = arith.divf %90, %89 : vector<8x1xf32>
    %92 = vector.broadcast %91 : vector<8x1xf32> to vector<8x8xf32>
    %93 = arith.mulf %87, %92 : vector<8x8xf32>
    %94 = arith.truncf %93 : vector<8x8xf32> to vector<8x8xbf16>
    %cst_33 = arith.constant dense<0.000000e+00> : vector<8x8xf32>
    %95 = tpu.matmul %94, %56, %cst_33 {dimension_numbers = #tpu.dot_dimension_numbers<[1], [0], [0], [1], [0, 0, 1, 1], [], []>} : vector<8x8xbf16>, vector<8x8xbf16>, vector<8x8xf32> -> vector<8x8xf32>
    %c0_34 = arith.constant 0 : index
    %c24 = arith.constant 24 : index
    %96 = vector.load %arg6[%c0_34, %c24] : memref<16x32xf32, #tpu.memory_space<vmem>>, vector<8x8xf32>
    tpu.vector_store %arg6[%c0_34, %c24], %95 {strides = array<i32>} : memref<16x32xf32, #tpu.memory_space<vmem>>, vector<8x8xf32>,
    %c1 = arith.constant 1 : index
    %c0_35 = arith.constant 0 : index
    %c0_36 = arith.constant 0 : index
    %97 = vector.load %arg2[%c1, %c0_35, %c0_36] : memref<2x1x8xf32, #tpu.memory_space<vmem>>, vector<1x1x8xf32>
    %98 = vector.shape_cast %97 : vector<1x1x8xf32> to vector<1x8xf32>
    %99 = vector.shape_cast %98 : vector<1x8xf32> to vector<1x8xf32>
    %100 = vector.broadcast %99 : vector<1x8xf32> to vector<8x8xf32>
    %101 = vector.extract_strided_slice %2 {offsets = [8, 32], sizes = [8, 8], strides = [1, 1]} : vector<16x64xf32> to vector<8x8xf32>
    %102 = vector.extract_strided_slice %2 {offsets = [8, 48], sizes = [8, 8], strides = [1, 1]} : vector<16x64xf32> to vector<8x8xf32>
    %103 = arith.truncf %101 : vector<8x8xf32> to vector<8x8xbf16>
    %104 = tpu.transpose %103, [1, 0] : vector<8x8xbf16> -> vector<8x8xbf16>
    %105 = arith.truncf %102 : vector<8x8xf32> to vector<8x8xbf16>
    %106 = vector.extract_strided_slice %2 {offsets = [8, 0], sizes = [8, 8], strides = [1, 1]} : vector<16x64xf32> to vector<8x8xf32>
    %107 = arith.truncf %106 : vector<8x8xf32> to vector<8x8xbf16>
    %cst_37 = arith.constant dense<0.000000e+00> : vector<8x8xf32>
    %108 = tpu.matmul %107, %104, %cst_37 {dimension_numbers = #tpu.dot_dimension_numbers<[1], [0], [0], [1], [0, 0, 1, 1], [], []>} : vector<8x8xbf16>, vector<8x8xbf16>, vector<8x8xf32> -> vector<8x8xf32>
    %cst_38 = arith.constant 0.353553385 : f32
    %109 = vector.broadcast %cst_38 : f32 to vector<8x8xf32>
    %110 = arith.mulf %108, %109 : vector<8x8xf32>
    %111 = arith.addf %110, %100 : vector<8x8xf32>
    %cst_39 = arith.constant dense<0xFF800000> : vector<8xf32>
    %112 = vector.multi_reduction <maximumf>, %111, %cst_39 [1] : vector<8x8xf32> to vector<8xf32>
    %113 = vector.shape_cast %112 : vector<8xf32> to vector<8x1xf32>
    %114 = vector.broadcast %113 : vector<8x1xf32> to vector<8x8xf32>
    %115 = arith.subf %111, %114 : vector<8x8xf32>
    %116 = math.exp %115 : vector<8x8xf32>
    %cst_40 = arith.constant dense<0.000000e+00> : vector<8xf32>
    %117 = vector.multi_reduction <add>, %116, %cst_40 [1] : vector<8x8xf32> to vector<8xf32>
    %118 = vector.shape_cast %117 : vector<8xf32> to vector<8x1xf32>
    %cst_41 = arith.constant 1.000000e+00 : f32
    %119 = vector.broadcast %cst_41 : f32 to vector<8x1xf32>
    %120 = arith.divf %119, %118 : vector<8x1xf32>
    %121 = vector.broadcast %120 : vector<8x1xf32> to vector<8x8xf32>
    %122 = arith.mulf %116, %121 : vector<8x8xf32>
    %123 = arith.truncf %122 : vector<8x8xf32> to vector<8x8xbf16>
    %cst_42 = arith.constant dense<0.000000e+00> : vector<8x8xf32>
    %124 = tpu.matmul %123, %105, %cst_42 {dimension_numbers = #tpu.dot_dimension_numbers<[1], [0], [0], [1], [0, 0, 1, 1], [], []>} : vector<8x8xbf16>, vector<8x8xbf16>, vector<8x8xf32> -> vector<8x8xf32>
    %c8_43 = arith.constant 8 : index
    %c0_44 = arith.constant 0 : index
    %125 = vector.load %arg6[%c8_43, %c0_44] : memref<16x32xf32, #tpu.memory_space<vmem>>, vector<8x8xf32>
    tpu.vector_store %arg6[%c8_43, %c0_44], %124 {strides = array<i32>} : memref<16x32xf32, #tpu.memory_space<vmem>>, vector<8x8xf32>,
    %126 = vector.extract_strided_slice %2 {offsets = [8, 8], sizes = [8, 8], strides = [1, 1]} : vector<16x64xf32> to vector<8x8xf32>
    %127 = arith.truncf %126 : vector<8x8xf32> to vector<8x8xbf16>
    %cst_45 = arith.constant dense<0.000000e+00> : vector<8x8xf32>
    %128 = tpu.matmul %127, %104, %cst_45 {dimension_numbers = #tpu.dot_dimension_numbers<[1], [0], [0], [1], [0, 0, 1, 1], [], []>} : vector<8x8xbf16>, vector<8x8xbf16>, vector<8x8xf32> -> vector<8x8xf32>
    %cst_46 = arith.constant 0.353553385 : f32
    %129 = vector.broadcast %cst_46 : f32 to vector<8x8xf32>
    %130 = arith.mulf %128, %129 : vector<8x8xf32>
    %131 = arith.addf %130, %100 : vector<8x8xf32>
    %cst_47 = arith.constant dense<0xFF800000> : vector<8xf32>
    %132 = vector.multi_reduction <maximumf>, %131, %cst_47 [1] : vector<8x8xf32> to vector<8xf32>
    %133 = vector.shape_cast %132 : vector<8xf32> to vector<8x1xf32>
    %134 = vector.broadcast %133 : vector<8x1xf32> to vector<8x8xf32>
    %135 = arith.subf %131, %134 : vector<8x8xf32>
    %136 = math.exp %135 : vector<8x8xf32>
    %cst_48 = arith.constant dense<0.000000e+00> : vector<8xf32>
    %137 = vector.multi_reduction <add>, %136, %cst_48 [1] : vector<8x8xf32> to vector<8xf32>
    %138 = vector.shape_cast %137 : vector<8xf32> to vector<8x1xf32>
    %cst_49 = arith.constant 1.000000e+00 : f32
    %139 = vector.broadcast %cst_49 : f32 to vector<8x1xf32>
    %140 = arith.divf %139, %138 : vector<8x1xf32>
    %141 = vector.broadcast %140 : vector<8x1xf32> to vector<8x8xf32>
    %142 = arith.mulf %136, %141 : vector<8x8xf32>
    %143 = arith.truncf %142 : vector<8x8xf32> to vector<8x8xbf16>
    %cst_50 = arith.constant dense<0.000000e+00> : vector<8x8xf32>
    %144 = tpu.matmul %143, %105, %cst_50 {dimension_numbers = #tpu.dot_dimension_numbers<[1], [0], [0], [1], [0, 0, 1, 1], [], []>} : vector<8x8xbf16>, vector<8x8xbf16>, vector<8x8xf32> -> vector<8x8xf32>
    %c8_51 = arith.constant 8 : index
    %c8_52 = arith.constant 8 : index
    %145 = vector.load %arg6[%c8_51, %c8_52] : memref<16x32xf32, #tpu.memory_space<vmem>>, vector<8x8xf32>
    tpu.vector_store %arg6[%c8_51, %c8_52], %144 {strides = array<i32>} : memref<16x32xf32, #tpu.memory_space<vmem>>, vector<8x8xf32>,
    %146 = vector.extract_strided_slice %2 {offsets = [8, 40], sizes = [8, 8], strides = [1, 1]} : vector<16x64xf32> to vector<8x8xf32>
    %147 = vector.extract_strided_slice %2 {offsets = [8, 56], sizes = [8, 8], strides = [1, 1]} : vector<16x64xf32> to vector<8x8xf32>
    %148 = arith.truncf %146 : vector<8x8xf32> to vector<8x8xbf16>
    %149 = tpu.transpose %148, [1, 0] : vector<8x8xbf16> -> vector<8x8xbf16>
    %150 = arith.truncf %147 : vector<8x8xf32> to vector<8x8xbf16>
    %151 = vector.extract_strided_slice %2 {offsets = [8, 16], sizes = [8, 8], strides = [1, 1]} : vector<16x64xf32> to vector<8x8xf32>
    %152 = arith.truncf %151 : vector<8x8xf32> to vector<8x8xbf16>
    %cst_53 = arith.constant dense<0.000000e+00> : vector<8x8xf32>
    %153 = tpu.matmul %152, %149, %cst_53 {dimension_numbers = #tpu.dot_dimension_numbers<[1], [0], [0], [1], [0, 0, 1, 1], [], []>} : vector<8x8xbf16>, vector<8x8xbf16>, vector<8x8xf32> -> vector<8x8xf32>
    %cst_54 = arith.constant 0.353553385 : f32
    %154 = vector.broadcast %cst_54 : f32 to vector<8x8xf32>
    %155 = arith.mulf %153, %154 : vector<8x8xf32>
    %156 = arith.addf %155, %100 : vector<8x8xf32>
    %cst_55 = arith.constant dense<0xFF800000> : vector<8xf32>
    %157 = vector.multi_reduction <maximumf>, %156, %cst_55 [1] : vector<8x8xf32> to vector<8xf32>
    %158 = vector.shape_cast %157 : vector<8xf32> to vector<8x1xf32>
    %159 = vector.broadcast %158 : vector<8x1xf32> to vector<8x8xf32>
    %160 = arith.subf %156, %159 : vector<8x8xf32>
    %161 = math.exp %160 : vector<8x8xf32>
    %cst_56 = arith.constant dense<0.000000e+00> : vector<8xf32>
    %162 = vector.multi_reduction <add>, %161, %cst_56 [1] : vector<8x8xf32> to vector<8xf32>
    %163 = vector.shape_cast %162 : vector<8xf32> to vector<8x1xf32>
    %cst_57 = arith.constant 1.000000e+00 : f32
    %164 = vector.broadcast %cst_57 : f32 to vector<8x1xf32>
    %165 = arith.divf %164, %163 : vector<8x1xf32>
    %166 = vector.broadcast %165 : vector<8x1xf32> to vector<8x8xf32>
    %167 = arith.mulf %161, %166 : vector<8x8xf32>
    %168 = arith.truncf %167 : vector<8x8xf32> to vector<8x8xbf16>
    %cst_58 = arith.constant dense<0.000000e+00> : vector<8x8xf32>
    %169 = tpu.matmul %168, %150, %cst_58 {dimension_numbers = #tpu.dot_dimension_numbers<[1], [0], [0], [1], [0, 0, 1, 1], [], []>} : vector<8x8xbf16>, vector<8x8xbf16>, vector<8x8xf32> -> vector<8x8xf32>
    %c8_59 = arith.constant 8 : index
    %c16_60 = arith.constant 16 : index
    %170 = vector.load %arg6[%c8_59, %c16_60] : memref<16x32xf32, #tpu.memory_space<vmem>>, vector<8x8xf32>
    tpu.vector_store %arg6[%c8_59, %c16_60], %169 {strides = array<i32>} : memref<16x32xf32, #tpu.memory_space<vmem>>, vector<8x8xf32>,
    %171 = vector.extract_strided_slice %2 {offsets = [8, 24], sizes = [8, 8], strides = [1, 1]} : vector<16x64xf32> to vector<8x8xf32>
    %172 = arith.truncf %171 : vector<8x8xf32> to vector<8x8xbf16>
    %cst_61 = arith.constant dense<0.000000e+00> : vector<8x8xf32>
    %173 = tpu.matmul %172, %149, %cst_61 {dimension_numbers = #tpu.dot_dimension_numbers<[1], [0], [0], [1], [0, 0, 1, 1], [], []>} : vector<8x8xbf16>, vector<8x8xbf16>, vector<8x8xf32> -> vector<8x8xf32>
    %cst_62 = arith.constant 0.353553385 : f32
    %174 = vector.broadcast %cst_62 : f32 to vector<8x8xf32>
    %175 = arith.mulf %173, %174 : vector<8x8xf32>
    %176 = arith.addf %175, %100 : vector<8x8xf32>
    %cst_63 = arith.constant dense<0xFF800000> : vector<8xf32>
    %177 = vector.multi_reduction <maximumf>, %176, %cst_63 [1] : vector<8x8xf32> to vector<8xf32>
    %178 = vector.shape_cast %177 : vector<8xf32> to vector<8x1xf32>
    %179 = vector.broadcast %178 : vector<8x1xf32> to vector<8x8xf32>
    %180 = arith.subf %176, %179 : vector<8x8xf32>
    %181 = math.exp %180 : vector<8x8xf32>
    %cst_64 = arith.constant dense<0.000000e+00> : vector<8xf32>
    %182 = vector.multi_reduction <add>, %181, %cst_64 [1] : vector<8x8xf32> to vector<8xf32>
    %183 = vector.shape_cast %182 : vector<8xf32> to vector<8x1xf32>
    %cst_65 = arith.constant 1.000000e+00 : f32
    %184 = vector.broadcast %cst_65 : f32 to vector<8x1xf32>
    %185 = arith.divf %184, %183 : vector<8x1xf32>
    %186 = vector.broadcast %185 : vector<8x1xf32> to vector<8x8xf32>
    %187 = arith.mulf %181, %186 : vector<8x8xf32>
    %188 = arith.truncf %187 : vector<8x8xf32> to vector<8x8xbf16>
    %cst_66 = arith.constant dense<0.000000e+00> : vector<8x8xf32>
    %189 = tpu.matmul %188, %150, %cst_66 {dimension_numbers = #tpu.dot_dimension_numbers<[1], [0], [0], [1], [0, 0, 1, 1], [], []>} : vector<8x8xbf16>, vector<8x8xbf16>, vector<8x8xf32> -> vector<8x8xf32>
    %c8_67 = arith.constant 8 : index
    %c24_68 = arith.constant 24 : index
    %190 = vector.load %arg6[%c8_67, %c24_68] : memref<16x32xf32, #tpu.memory_space<vmem>>, vector<8x8xf32>
    tpu.vector_store %arg6[%c8_67, %c24_68], %189 {strides = array<i32>} : memref<16x32xf32, #tpu.memory_space<vmem>>, vector<8x8xf32>,
    %c0_69 = arith.constant 0 : index
    %c0_70 = arith.constant 0 : index
    %191 = vector.load %arg6[%c0_69, %c0_70] : memref<16x32xf32, #tpu.memory_space<vmem>>, vector<16x32xf32>
    %192 = arith.truncf %191 : vector<16x32xf32> to vector<16x32xbf16>
    %c0_71 = arith.constant 0 : index
    %c0_72 = arith.constant 0 : index
    %193 = vector.load %arg4[%c0_71, %c0_72] : memref<32x128xbf16, #tpu.memory_space<vmem>>, vector<32x128xbf16>
    %cst_73 = arith.constant dense<0.000000e+00> : vector<16x128xf32>
    %194 = tpu.matmul %192, %193, %cst_73 {dimension_numbers = #tpu.dot_dimension_numbers<[1], [0], [0], [1], [0, 0, 1, 1], [], []>} : vector<16x32xbf16>, vector<32x128xbf16>, vector<16x128xf32> -> vector<16x128xf32>
    %c0_74 = arith.constant 0 : index
    %c0_75 = arith.constant 0 : index
    %195 = vector.load %arg5[%c0_74, %c0_75] : memref<16x128xf32, #tpu.memory_space<vmem>>, vector<16x128xf32>
    tpu.vector_store %arg5[%c0_74, %c0_75], %194 {strides = array<i32>} : memref<16x128xf32, #tpu.memory_space<vmem>>, vector<16x128xf32>,
    return
  }
  func.func @transform_0(%arg0: i32) -> (i32, i32) {
    %c0_i32 = arith.constant 0 : i32
    %c0_i32_0 = arith.constant 0 : i32
    %c0_i32_1 = arith.constant 0 : i32
    return %c0_i32, %c0_i32_0 : i32, i32
  }
  func.func @transform_1(%arg0: i32) -> (i32, i32, i32) {
    %c0_i32 = arith.constant 0 : i32
    %c0_i32_0 = arith.constant 0 : i32
    %c0_i32_1 = arith.constant 0 : i32
    %c0_i32_2 = arith.constant 0 : i32
    return %c0_i32, %c0_i32_0, %c0_i32_1 : i32, i32, i32
  }
  func.func @transform_2(%arg0: i32) -> (i32, i32) {
    %c0_i32 = arith.constant 0 : i32
    %c0_i32_0 = arith.constant 0 : i32
    %c0_i32_1 = arith.constant 0 : i32
    return %c0_i32, %c0_i32_0 : i32, i32
  }
  func.func @transform_3(%arg0: i32) -> (i32, i32) {
    %c0_i32 = arith.constant 0 : i32
    %c0_i32_0 = arith.constant 0 : i32
    %c0_i32_1 = arith.constant 0 : i32
    return %c0_i32, %c0_i32_0 : i32, i32
  }
  func.func @transform_4(%arg0: i32) -> (i32, i32) {
    %c0_i32 = arith.constant 0 : i32
    %c0_i32_0 = arith.constant 0 : i32
    %c0_i32_1 = arith.constant 0 : i32
    return %c0_i32, %c0_i32_0 : i32, i32
  }
}

</mosaic_0001>

<llo_original>
// kernel: tpu_custom_call.1
$region0: #{tpu_custom_call.1}
  #allocation0 [shape = 'u32[]', space=smem, size = 0x4, offset = 0x4, fixed_abs, tag = 'smem constant byte address 0x4 - core index']
  #allocation1 [shape = 'u32[72,128]{1,0:T(1,128)}', space=vmem, size = 0x9000, scoped, tag = 'internal scratch']
  #allocation2 [shape = 'f32[16,32]{1,0:T(8,128)}', space=vmem, size = 0x2000, scoped, tag = 'scratch operand']
  %s0 = inlined_call_operand.hbm [shape: bf16[16,32], index: 0, kind: input, shape index: {}]
  %s1 = inlined_call_operand.hbm [shape: f32[2,1,8], index: 1, kind: input, shape index: {}]
  %s2 = inlined_call_operand.hbm [shape: bf16[32,64], index: 2, kind: input, shape index: {}]
  %s3 = inlined_call_operand.hbm [shape: bf16[32,128], index: 3, kind: input, shape index: {}]
  %s4 = inlined_call_operand.hbm [shape: f32[16,128], index: 4, kind: output, shape index: {}]
  %s5 = sld [smem:[#allocation0]]
  $region42: #{tpu_custom_call.1} parent=0
    _
  %s7 = ssub.s32 1, %s5
  %s8 = scalar_select 0, %s7, %s5
  $region1: #{tpu_custom_call.1} parent=0
    #allocation3 [shape = 'u8[4096]{0}', space=vmem, size = 0x1000, scoped, tag = 'input window, operand 0, single buffered']
    #allocation4 [shape = 's32[1]{0}', space=sflag, size = 0x4, scoped, tag = 'scoped memory for tpu_custom_call.1']
    #allocation5 [shape = 's32[1]{0}', space=sflag, size = 0x4, scoped, tag = 'scoped memory for tpu_custom_call.1']
    #allocation6 [shape = 'u8[1024]{0}', space=vmem, size = 0x400, scoped, tag = 'input window, operand 1, single buffered']
    #allocation7 [shape = 's32[1]{0}', space=sflag, size = 0x4, scoped, tag = 'scoped memory for tpu_custom_call.1']
    #allocation8 [shape = 'u8[8192]{0}', space=vmem, size = 0x2000, scoped, tag = 'input window, operand 2, single buffered']
    #allocation9 [shape = 'u8[8192]{0}', space=vmem, size = 0x2000, scoped, tag = 'input window, operand 3, single buffered']
    #allocation10 [shape = 's32[1]{0}', space=sflag, size = 0x4, scoped, tag = 'scoped memory for tpu_custom_call.1']
    #allocation11 [shape = 'u8[8192]{0}', space=vmem, size = 0x2000, scoped, tag = 'output window, operand 0, single buffered']
    %9 = vsyncpa [#allocation4], 0
    %10 = vsyncpa [#allocation7], 0
    %11 = vsyncpa [#allocation10], 0
    %12 = vsyncpa [#allocation5], 0
    // Predicated region
    $region2: #{tpu_custom_call.1} parent=1 // pred_check
      _
    $region3: #{tpu_custom_call.1} parent=1 // pred_check_branch
      %14 = sbr.rel (0) target = $region5
    $region4: #{tpu_custom_call.1} parent=1 // pred_region
      %16 = vsyncadd [#allocation4], 0
      %s17 = sshll.u32 %s0, 4
      %s18 = int_to_ptr.hbm [resolvable:$true] %s17
      %s19 = sshll.u32 [#allocation3], 4
      %s20 = int_to_ptr.vmem [resolvable:$true] %s19
      %25 = dma.hbm_to_vmem [thread:$0]  %s18, 128, %s20, [#allocation4], 64, 64, 4
    $region5: #{tpu_custom_call.1} parent=1 // pred_fallthru
      _
    // Predicated region
    $region6: #{tpu_custom_call.1} parent=1 // pred_check
      _
    $region7: #{tpu_custom_call.1} parent=1 // pred_check_branch
      %27 = sbr.rel (0) target = $region9
    $region8: #{tpu_custom_call.1} parent=1 // pred_region
      %29 = vsyncadd [#allocation7], 0
      %s30 = sshll.u32 %s1, 4
      %s31 = int_to_ptr.hbm [resolvable:$true] %s30
      %s32 = sshll.u32 [#allocation6], 4
      %s33 = int_to_ptr.vmem [resolvable:$true] %s32
      %38 = dma.hbm_to_vmem [thread:$0]  %s31, 32, %s33, [#allocation7], 16, 16, 1
    $region9: #{tpu_custom_call.1} parent=1 // pred_fallthru
      _
    // Predicated region
    $region10: #{tpu_custom_call.1} parent=1 // pred_check
      _
    $region11: #{tpu_custom_call.1} parent=1 // pred_check_branch
      %40 = sbr.rel (0) target = $region13
    $region12: #{tpu_custom_call.1} parent=1 // pred_region
      %42 = vsyncadd [#allocation7], 0
      %s43 = sshll.u32 %s2, 4
      %s44 = int_to_ptr.hbm [resolvable:$true] %s43
      %s45 = sshll.u32 [#allocation8], 4
      %s46 = int_to_ptr.vmem [resolvable:$true] %s45
      %51 = dma.hbm_to_vmem [thread:$0]  %s44, 256, %s46, [#allocation7], 64, 64, 4
    $region13: #{tpu_custom_call.1} parent=1 // pred_fallthru
      _
    // Predicated region
    $region14: #{tpu_custom_call.1} parent=1 // pred_check
      _
    $region15: #{tpu_custom_call.1} parent=1 // pred_check_branch
      %53 = sbr.rel (0) target = $region17
    $region16: #{tpu_custom_call.1} parent=1 // pred_region
      %55 = vsyncadd [#allocation10], 0
      %s56 = sshll.u32 %s3, 4
      %s57 = int_to_ptr.hbm [resolvable:$true] %s56
      %s58 = sshll.u32 [#allocation9], 4
      %s59 = int_to_ptr.vmem [resolvable:$true] %s58
      %64 = dma.hbm_to_vmem [thread:$0]  %s57, 256, %s59, [#allocation10], 64, 64, 4
    $region17: #{tpu_custom_call.1} parent=1 // pred_fallthru
      _
    // Predicated region
    $region18: #{tpu_custom_call.1} parent=1 // pred_check
      _
    $region19: #{tpu_custom_call.1} parent=1 // pred_check_branch
      %66 = sbr.rel (0) target = $region21
    $region20: #{tpu_custom_call.1} parent=1 // pred_region
      %68 = dma.done [#allocation4], 128
    $region21: #{tpu_custom_call.1} parent=1 // pred_fallthru
      _
    // Predicated region
    $region22: #{tpu_custom_call.1} parent=1 // pred_check
      _
    $region23: #{tpu_custom_call.1} parent=1 // pred_check_branch
      %70 = sbr.rel (0) target = $region25
    $region24: #{tpu_custom_call.1} parent=1 // pred_region
      %72 = dma.done [#allocation7], 32
    $region25: #{tpu_custom_call.1} parent=1 // pred_fallthru
      _
    // Predicated region
    $region26: #{tpu_custom_call.1} parent=1 // pred_check
      _
    $region27: #{tpu_custom_call.1} parent=1 // pred_check_branch
      %74 = sbr.rel (0) target = $region29
    $region28: #{tpu_custom_call.1} parent=1 // pred_region
      %76 = dma.done [#allocation7], 256
    $region29: #{tpu_custom_call.1} parent=1 // pred_fallthru
      _
    // Predicated region
    $region30: #{tpu_custom_call.1} parent=1 // pred_check
      _
    $region31: #{tpu_custom_call.1} parent=1 // pred_check_branch
      %78 = sbr.rel (0) target = $region33
    $region32: #{tpu_custom_call.1} parent=1 // pred_region
      %80 = dma.done [#allocation10], 256
    $region33: #{tpu_custom_call.1} parent=1 // pred_fallthru
      _
    %v82 = vld [vmem:[#allocation3] sm:$0xf]
    %v83 = vld [vmem:[#allocation3 + $0x4] sm:$0xf]
    %v84 = vld [vmem:[#allocation8] sm:$0xf]
    %v85 = vld [vmem:[#allocation8 + $0x4] sm:$0xf]
    %v86 = vld [vmem:[#allocation8 + $0x8] sm:$0xf]
    %v87 = vld [vmem:[#allocation8 + $0xc] sm:$0xf]
    %v90 = vunpack.c.l.b16 %v82
    %v91 = vunpack.c.l.b16 %v83
    %v92 = vpack.c.b16 %v91, %v90
    %v97 = vunpack.c.l.b16 %v84
    %v98 = vunpack.c.l.b16 %v85
    %v99 = vunpack.c.l.b16 %v86
    %v100 = vunpack.c.l.b16 %v87
    %v101 = vpack.c.b16 %v98, %v97
    %v102 = vpack.c.b16 %v100, %v99
    %vm105 = vcmask 261120
    %v107 = vsel %vm105, %v92, 0
    %109 = vmatpush.bf16.msra.mxu0 0
    %110 = vmatpush.bf16.msra.mxu0 0
    %111 = vmatpush.bf16.msra.mxu0 0
    %112 = vmatpush.bf16.msra.mxu0 0
    %113 = vmatpush.bf16.msra.mxu0 0
    %114 = vmatpush.bf16.msra.mxu0 0
    %115 = vmatpush.bf16.msra.mxu0 %v102
    %116 = vmatpush.bf16.msra.mxu0 %v101
    %117 = vmatmul.bf16.gmra.mxu0 %v107
    %v118 = vpop.f32.mrf.mxu0
    %v119 = vadd.f32 0.0, %v118
    %v120 = vpop.f32.mrf.mxu0
    %v121 = vadd.f32 0.0, %v120
    %122 = vdwg.mxu0
    %v123 = vld [vmem:[#allocation6] sm:$0x1]
    %v125 = vperm.slane %v123, 0
    %v127 = vpack.c.bf16 %v119, %v119
    %129 = vrot.lane.b32.xlu0 %v127, 96
    %v130 = vpop.permute.xlu0 %129
    %vm131 = vcmask 64512
    %v133 = vsel %vm131, %v127, 0
    %v136 = vsel %vm131, %v130, 0
    %138 = vmatpush.bf16.xpose.msra.mxu0 0
    %139 = vmatpush.bf16.xpose.msra.mxu0 0
    %140 = vmatpush.bf16.xpose.msra.mxu0 0
    %141 = vmatpush.bf16.xpose.msra.mxu0 0
    %142 = vmatpush.bf16.xpose.msra.mxu0 0
    %143 = vmatpush.bf16.xpose.msra.mxu0 0
    %144 = vmatpush.bf16.xpose.msra.mxu0 0
    %145 = vmatpush.bf16.xpose.msra.mxu0 %v136
    %146 = vmatmul.bf16.gmra.mxu0 %v133
    %v147 = vpop.f32.mrf.mxu0
    %v148 = vadd.f32 0.0, %v147
    %v149 = vpop.f32.mrf.mxu0
    %150 = vdwg.mxu0
    %v151 = vmul.f32 %v148, 0.35355338
    %v152 = vadd.f32 %v151, %v125
    %v153 = vsel %vm131, %v152, -inf
    %154 = vmax.xlane.f32.xlu0 %v153
    %v155 = vpop.xlane.xlu0 %154
    %v156 = vsub.f32 %v152, %v155
    %v157 = vmul.f32 %v156, 1.442695
    %v158 = vpow.pop %v157
    %v159 = vsel %vm131, %v158, 0.0
    %160 = vadd.xlane.f32.xlu0 %v159
    %v161 = vpop.xlane.xlu0 %160
    %v162 = vrcp.pop %v161
    %v163 = vmul.f32 %v161, %v162
    %v164 = vsub.f32 1.0, %v163
    %v165 = vmul.f32 %v162, %v164
    %v166 = vadd.f32 %v162, %v165
    %vm167 = vweird.f32 %v161
    %vm168 = vweird.f32 %v162
    %vm169 = vmor %vm167, %vm168
    %v170 = vsel %vm169, %v162, %v166
    %v171 = vand.u32 2147483647, %v161
    %vm172 = vcmp.eq.f32.partialorder %v171, 8.507059e+37
    %v173 = vand.u32 %v161, 2147483648
    %v174 = vor.u32 1.1754944e-38, %v173
    %v175 = vsel %vm172, %v174, %v170
    %v176 = vmul.f32 1.0, %v175
    %v177 = vmul.f32 %v158, %v176
    %v178 = vpack.c.bf16 %v177, %v177
    %179 = vrot.lane.b32.xlu0 %v127, 80
    %v180 = vpop.permute.xlu0 %179
    %v182 = vsel %vm131, %v178, 0
    %vm184 = vcmask 1043456
    %v186 = vsel %vm184, %v180, 0
    %188 = vmatpush.bf16.msra.mxu0 0
    %189 = vmatpush.bf16.msra.mxu0 0
    %190 = vmatpush.bf16.msra.mxu0 0
    %191 = vmatpush.bf16.msra.mxu0 0
    %192 = vmatpush.bf16.msra.mxu0 0
    %193 = vmatpush.bf16.msra.mxu0 0
    %194 = vmatpush.bf16.msra.mxu0 0
    %195 = vmatpush.bf16.msra.mxu0 %v186
    %196 = vmatmul.bf16.gmra.mxu0 %v182
    %v197 = vpop.f32.mrf.mxu0
    %v198 = vadd.f32 0.0, %v197
    %v199 = vpop.f32.mrf.mxu0
    %200 = vdwg.mxu0
    %201 = vst.msk [vmem:[#allocation2] sm:$0xff] %vm131, %v198
    %202 = vrot.lane.b32.xlu0 %v127, 120
    %v203 = vpop.permute.xlu0 %202
    %v205 = vsel %vm131, %v203, 0
    %207 = vmatpush.bf16.xpose.msra.mxu0 0
    %208 = vmatpush.bf16.xpose.msra.mxu0 0
    %209 = vmatpush.bf16.xpose.msra.mxu0 0
    %210 = vmatpush.bf16.xpose.msra.mxu0 0
    %211 = vmatpush.bf16.xpose.msra.mxu0 0
    %212 = vmatpush.bf16.xpose.msra.mxu0 0
    %213 = vmatpush.bf16.xpose.msra.mxu0 0
    %214 = vmatpush.bf16.xpose.msra.mxu0 %v136
    %215 = vmatmul.bf16.gmra.mxu0 %v205
    %v216 = vpop.f32.mrf.mxu0
    %v217 = vadd.f32 0.0, %v216
    %v218 = vpop.f32.mrf.mxu0
    %219 = vdwg.mxu0
    %v220 = vmul.f32 %v217, 0.35355338
    %v221 = vadd.f32 %v220, %v125
    %v222 = vsel %vm131, %v221, -inf
    %223 = vmax.xlane.f32.xlu0 %v222
    %v224 = vpop.xlane.xlu0 %223
    %v225 = vsub.f32 %v221, %v224
    %v226 = vmul.f32 %v225, 1.442695
    %v227 = vpow.pop %v226
    %v228 = vsel %vm131, %v227, 0.0
    %229 = vadd.xlane.f32.xlu0 %v228
    %v230 = vpop.xlane.xlu0 %229
    %v231 = vrcp.pop %v230
    %v232 = vmul.f32 %v230, %v231
    %v233 = vsub.f32 1.0, %v232
    %v234 = vmul.f32 %v231, %v233
    %v235 = vadd.f32 %v231, %v234
    %vm236 = vweird.f32 %v230
    %vm237 = vweird.f32 %v231
    %vm238 = vmor %vm236, %vm237
    %v239 = vsel %vm238, %v231, %v235
    %v240 = vand.u32 2147483647, %v230
    %vm241 = vcmp.eq.f32.partialorder %v240, 8.507059e+37
    %v242 = vand.u32 %v230, 2147483648
    %v243 = vor.u32 1.1754944e-38, %v242
    %v244 = vsel %vm241, %v243, %v239
    %v245 = vmul.f32 1.0, %v244
    %v246 = vmul.f32 %v227, %v245
    %v247 = vpack.c.bf16 %v246, %v246
    %v249 = vsel %vm131, %v247, 0
    %251 = vmatpush.bf16.msra.mxu0 0
    %252 = vmatpush.bf16.msra.mxu0 0
    %253 = vmatpush.bf16.msra.mxu0 0
    %254 = vmatpush.bf16.msra.mxu0 0
    %255 = vmatpush.bf16.msra.mxu0 0
    %256 = vmatpush.bf16.msra.mxu0 0
    %257 = vmatpush.bf16.msra.mxu0 0
    %258 = vmatpush.bf16.msra.mxu0 %v186
    %259 = vmatmul.bf16.gmra.mxu0 %v249
    %v260 = vpop.f32.mrf.mxu0
    %v261 = vadd.f32 0.0, %v260
    %v262 = vpop.f32.mrf.mxu0
    %263 = vdwg.mxu0
    %265 = vrot.lane.b32.xlu0 %v261, 8
    %v266 = vpop.permute.xlu0 %265
    %vm268 = vcmask 130112
    %269 = vst.msk [vmem:[#allocation2] sm:$0xff] %vm268, %v266
    %270 = vrot.lane.b32.xlu0 %v127, 112
    %v271 = vpop.permute.xlu0 %270
    %272 = vrot.lane.b32.xlu0 %v127, 88
    %v273 = vpop.permute.xlu0 %272
    %v275 = vsel %vm131, %v271, 0
    %v278 = vsel %vm131, %v273, 0
    %280 = vmatpush.bf16.xpose.msra.mxu0 0
    %281 = vmatpush.bf16.xpose.msra.mxu0 0
    %282 = vmatpush.bf16.xpose.msra.mxu0 0
    %283 = vmatpush.bf16.xpose.msra.mxu0 0
    %284 = vmatpush.bf16.xpose.msra.mxu0 0
    %285 = vmatpush.bf16.xpose.msra.mxu0 0
    %286 = vmatpush.bf16.xpose.msra.mxu0 0
    %287 = vmatpush.bf16.xpose.msra.mxu0 %v278
    %288 = vmatmul.bf16.gmra.mxu0 %v275
    %v289 = vpop.f32.mrf.mxu0
    %v290 = vadd.f32 0.0, %v289
    %v291 = vpop.f32.mrf.mxu0
    %292 = vdwg.mxu0
    %v293 = vmul.f32 %v290, 0.35355338
    %v294 = vadd.f32 %v293, %v125
    %v295 = vsel %vm131, %v294, -inf
    %296 = vmax.xlane.f32.xlu0 %v295
    %v297 = vpop.xlane.xlu0 %296
    %v298 = vsub.f32 %v294, %v297
    %v299 = vmul.f32 %v298, 1.442695
    %v300 = vpow.pop %v299
    %v301 = vsel %vm131, %v300, 0.0
    %302 = vadd.xlane.f32.xlu0 %v301
    %v303 = vpop.xlane.xlu0 %302
    %v304 = vrcp.pop %v303
    %v305 = vmul.f32 %v303, %v304
    %v306 = vsub.f32 1.0, %v305
    %v307 = vmul.f32 %v304, %v306
    %v308 = vadd.f32 %v304, %v307
    %vm309 = vweird.f32 %v303
    %vm310 = vweird.f32 %v304
    %vm311 = vmor %vm309, %vm310
    %v312 = vsel %vm311, %v304, %v308
    %v313 = vand.u32 2147483647, %v303
    %vm314 = vcmp.eq.f32.partialorder %v313, 8.507059e+37
    %v315 = vand.u32 %v303, 2147483648
    %v316 = vor.u32 1.1754944e-38, %v315
    %v317 = vsel %vm314, %v316, %v312
    %v318 = vmul.f32 1.0, %v317
    %v319 = vmul.f32 %v300, %v318
    %v320 = vpack.c.bf16 %v319, %v319
    %321 = vrot.lane.b32.xlu0 %v127, 72
    %v322 = vpop.permute.xlu0 %321
    %v324 = vsel %vm131, %v320, 0
    %v327 = vsel %vm184, %v322, 0
    %329 = vmatpush.bf16.msra.mxu0 0
    %330 = vmatpush.bf16.msra.mxu0 0
    %331 = vmatpush.bf16.msra.mxu0 0
    %332 = vmatpush.bf16.msra.mxu0 0
    %333 = vmatpush.bf16.msra.mxu0 0
    %334 = vmatpush.bf16.msra.mxu0 0
    %335 = vmatpush.bf16.msra.mxu0 0
    %336 = vmatpush.bf16.msra.mxu0 %v327
    %337 = vmatmul.bf16.gmra.mxu0 %v324
    %v338 = vpop.f32.mrf.mxu0
    %v339 = vadd.f32 0.0, %v338
    %v340 = vpop.f32.mrf.mxu0
    %341 = vdwg.mxu0
    %343 = vrot.lane.b32.xlu0 %v339, 16
    %v344 = vpop.permute.xlu0 %343
    %vm346 = vcmask 195712
    %347 = vst.msk [vmem:[#allocation2] sm:$0xff] %vm346, %v344
    %348 = vrot.lane.b32.xlu0 %v127, 104
    %v349 = vpop.permute.xlu0 %348
    %v351 = vsel %vm131, %v349, 0
    %353 = vmatpush.bf16.xpose.msra.mxu0 0
    %354 = vmatpush.bf16.xpose.msra.mxu0 0
    %355 = vmatpush.bf16.xpose.msra.mxu0 0
    %356 = vmatpush.bf16.xpose.msra.mxu0 0
    %357 = vmatpush.bf16.xpose.msra.mxu0 0
    %358 = vmatpush.bf16.xpose.msra.mxu0 0
    %359 = vmatpush.bf16.xpose.msra.mxu0 0
    %360 = vmatpush.bf16.xpose.msra.mxu0 %v278
    %361 = vmatmul.bf16.gmra.mxu0 %v351
    %v362 = vpop.f32.mrf.mxu0
    %v363 = vadd.f32 0.0, %v362
    %v364 = vpop.f32.mrf.mxu0
    %365 = vdwg.mxu0
    %v366 = vmul.f32 %v363, 0.35355338
    %v367 = vadd.f32 %v366, %v125
    %v368 = vsel %vm131, %v367, -inf
    %369 = vmax.xlane.f32.xlu0 %v368
    %v370 = vpop.xlane.xlu0 %369
    %v371 = vsub.f32 %v367, %v370
    %v372 = vmul.f32 %v371, 1.442695
    %v373 = vpow.pop %v372
    %v374 = vsel %vm131, %v373, 0.0
    %375 = vadd.xlane.f32.xlu0 %v374
    %v376 = vpop.xlane.xlu0 %375
    %v377 = vrcp.pop %v376
    %v378 = vmul.f32 %v376, %v377
    %v379 = vsub.f32 1.0, %v378
    %v380 = vmul.f32 %v377, %v379
    %v381 = vadd.f32 %v377, %v380
    %vm382 = vweird.f32 %v376
    %vm383 = vweird.f32 %v377
    %vm384 = vmor %vm382, %vm383
    %v385 = vsel %vm384, %v377, %v381
    %v386 = vand.u32 2147483647, %v376
    %vm387 = vcmp.eq.f32.partialorder %v386, 8.507059e+37
    %v388 = vand.u32 %v376, 2147483648
    %v389 = vor.u32 1.1754944e-38, %v388
    %v390 = vsel %vm387, %v389, %v385
    %v391 = vmul.f32 1.0, %v390
    %v392 = vmul.f32 %v373, %v391
    %v393 = vpack.c.bf16 %v392, %v392
    %v395 = vsel %vm131, %v393, 0
    %397 = vmatpush.bf16.msra.mxu0 0
    %398 = vmatpush.bf16.msra.mxu0 0
    %399 = vmatpush.bf16.msra.mxu0 0
    %400 = vmatpush.bf16.msra.mxu0 0
    %401 = vmatpush.bf16.msra.mxu0 0
    %402 = vmatpush.bf16.msra.mxu0 0
    %403 = vmatpush.bf16.msra.mxu0 0
    %404 = vmatpush.bf16.msra.mxu0 %v327
    %405 = vmatmul.bf16.gmra.mxu0 %v395
    %v406 = vpop.f32.mrf.mxu0
    %v407 = vadd.f32 0.0, %v406
    %v408 = vpop.f32.mrf.mxu0
    %409 = vdwg.mxu0
    %411 = vrot.lane.b32.xlu0 %v407, 24
    %v412 = vpop.permute.xlu0 %411
    %vm414 = vcmask 261312
    %415 = vst.msk [vmem:[#allocation2] sm:$0xff] %vm414, %v412
    %s416 = scalar_lea.vmem [#allocation6], 1
    %v417 = vld [vmem:[%s416] sm:$0x1]
    %v419 = vperm.slane %v417, 0
    %v421 = vpack.c.bf16 %v121, %v121
    %423 = vrot.lane.b32.xlu0 %v421, 96
    %v424 = vpop.permute.xlu0 %423
    %v426 = vsel %vm131, %v421, 0
    %v429 = vsel %vm131, %v424, 0
    %431 = vmatpush.bf16.xpose.msra.mxu0 0
    %432 = vmatpush.bf16.xpose.msra.mxu0 0
    %433 = vmatpush.bf16.xpose.msra.mxu0 0
    %434 = vmatpush.bf16.xpose.msra.mxu0 0
    %435 = vmatpush.bf16.xpose.msra.mxu0 0
    %436 = vmatpush.bf16.xpose.msra.mxu0 0
    %437 = vmatpush.bf16.xpose.msra.mxu0 0
    %438 = vmatpush.bf16.xpose.msra.mxu0 %v429
    %439 = vmatmul.bf16.gmra.mxu0 %v426
    %v440 = vpop.f32.mrf.mxu0
    %v441 = vadd.f32 0.0, %v440
    %v442 = vpop.f32.mrf.mxu0
    %443 = vdwg.mxu0
    %v444 = vmul.f32 %v441, 0.35355338
    %v445 = vadd.f32 %v444, %v419
    %v446 = vsel %vm131, %v445, -inf
    %447 = vmax.xlane.f32.xlu0 %v446
    %v448 = vpop.xlane.xlu0 %447
    %v449 = vsub.f32 %v445, %v448
    %v450 = vmul.f32 %v449, 1.442695
    %v451 = vpow.pop %v450
    %v452 = vsel %vm131, %v451, 0.0
    %453 = vadd.xlane.f32.xlu0 %v452
    %v454 = vpop.xlane.xlu0 %453
    %v455 = vrcp.pop %v454
    %v456 = vmul.f32 %v454, %v455
    %v457 = vsub.f32 1.0, %v456
    %v458 = vmul.f32 %v455, %v457
    %v459 = vadd.f32 %v455, %v458
    %vm460 = vweird.f32 %v454
    %vm461 = vweird.f32 %v455
    %vm462 = vmor %vm460, %vm461
    %v463 = vsel %vm462, %v455, %v459
    %v464 = vand.u32 2147483647, %v454
    %vm465 = vcmp.eq.f32.partialorder %v464, 8.507059e+37
    %v466 = vand.u32 %v454, 2147483648
    %v467 = vor.u32 1.1754944e-38, %v466
    %v468 = vsel %vm465, %v467, %v463
    %v469 = vmul.f32 1.0, %v468
    %v470 = vmul.f32 %v451, %v469
    %v471 = vpack.c.bf16 %v470, %v470
    %472 = vrot.lane.b32.xlu0 %v421, 80
    %v473 = vpop.permute.xlu0 %472
    %v475 = vsel %vm131, %v471, 0
    %v478 = vsel %vm184, %v473, 0
    %480 = vmatpush.bf16.msra.mxu0 0
    %481 = vmatpush.bf16.msra.mxu0 0
    %482 = vmatpush.bf16.msra.mxu0 0
    %483 = vmatpush.bf16.msra.mxu0 0
    %484 = vmatpush.bf16.msra.mxu0 0
    %485 = vmatpush.bf16.msra.mxu0 0
    %486 = vmatpush.bf16.msra.mxu0 0
    %487 = vmatpush.bf16.msra.mxu0 %v478
    %488 = vmatmul.bf16.gmra.mxu0 %v475
    %v489 = vpop.f32.mrf.mxu0
    %v490 = vadd.f32 0.0, %v489
    %v491 = vpop.f32.mrf.mxu0
    %492 = vdwg.mxu0
    %493 = vst.msk [vmem:[#allocation2 + $0x8] sm:$0xff] %vm131, %v490
    %494 = vrot.lane.b32.xlu0 %v421, 120
    %v495 = vpop.permute.xlu0 %494
    %v497 = vsel %vm131, %v495, 0
    %499 = vmatpush.bf16.xpose.msra.mxu0 0
    %500 = vmatpush.bf16.xpose.msra.mxu0 0
    %501 = vmatpush.bf16.xpose.msra.mxu0 0
    %502 = vmatpush.bf16.xpose.msra.mxu0 0
    %503 = vmatpush.bf16.xpose.msra.mxu0 0
    %504 = vmatpush.bf16.xpose.msra.mxu0 0
    %505 = vmatpush.bf16.xpose.msra.mxu0 0
    %506 = vmatpush.bf16.xpose.msra.mxu0 %v429
    %507 = vmatmul.bf16.gmra.mxu0 %v497
    %v508 = vpop.f32.mrf.mxu0
    %v509 = vadd.f32 0.0, %v508
    %v510 = vpop.f32.mrf.mxu0
    %511 = vdwg.mxu0
    %v512 = vmul.f32 %v509, 0.35355338
    %v513 = vadd.f32 %v512, %v419
    %v514 = vsel %vm131, %v513, -inf
    %515 = vmax.xlane.f32.xlu0 %v514
    %v516 = vpop.xlane.xlu0 %515
    %v517 = vsub.f32 %v513, %v516
    %v518 = vmul.f32 %v517, 1.442695
    %v519 = vpow.pop %v518
    %v520 = vsel %vm131, %v519, 0.0
    %521 = vadd.xlane.f32.xlu0 %v520
    %v522 = vpop.xlane.xlu0 %521
    %v523 = vrcp.pop %v522
    %v524 = vmul.f32 %v522, %v523
    %v525 = vsub.f32 1.0, %v524
    %v526 = vmul.f32 %v523, %v525
    %v527 = vadd.f32 %v523, %v526
    %vm528 = vweird.f32 %v522
    %vm529 = vweird.f32 %v523
    %vm530 = vmor %vm528, %vm529
    %v531 = vsel %vm530, %v523, %v527
    %v532 = vand.u32 2147483647, %v522
    %vm533 = vcmp.eq.f32.partialorder %v532, 8.507059e+37
    %v534 = vand.u32 %v522, 2147483648
    %v535 = vor.u32 1.1754944e-38, %v534
    %v536 = vsel %vm533, %v535, %v531
    %v537 = vmul.f32 1.0, %v536
    %v538 = vmul.f32 %v519, %v537
    %v539 = vpack.c.bf16 %v538, %v538
    %v541 = vsel %vm131, %v539, 0
    %543 = vmatpush.bf16.msra.mxu0 0
    %544 = vmatpush.bf16.msra.mxu0 0
    %545 = vmatpush.bf16.msra.mxu0 0
    %546 = vmatpush.bf16.msra.mxu0 0
    %547 = vmatpush.bf16.msra.mxu0 0
    %548 = vmatpush.bf16.msra.mxu0 0
    %549 = vmatpush.bf16.msra.mxu0 0
    %550 = vmatpush.bf16.msra.mxu0 %v478
    %551 = vmatmul.bf16.gmra.mxu0 %v541
    %v552 = vpop.f32.mrf.mxu0
    %v553 = vadd.f32 0.0, %v552
    %v554 = vpop.f32.mrf.mxu0
    %555 = vdwg.mxu0
    %557 = vrot.lane.b32.xlu0 %v553, 8
    %v558 = vpop.permute.xlu0 %557
    %560 = vst.msk [vmem:[#allocation2 + $0x8] sm:$0xff] %vm268, %v558
    %561 = vrot.lane.b32.xlu0 %v421, 112
    %v562 = vpop.permute.xlu0 %561
    %563 = vrot.lane.b32.xlu0 %v421, 88
    %v564 = vpop.permute.xlu0 %563
    %v566 = vsel %vm131, %v562, 0
    %v569 = vsel %vm131, %v564, 0
    %571 = vmatpush.bf16.xpose.msra.mxu0 0
    %572 = vmatpush.bf16.xpose.msra.mxu0 0
    %573 = vmatpush.bf16.xpose.msra.mxu0 0
    %574 = vmatpush.bf16.xpose.msra.mxu0 0
    %575 = vmatpush.bf16.xpose.msra.mxu0 0
    %576 = vmatpush.bf16.xpose.msra.mxu0 0
    %577 = vmatpush.bf16.xpose.msra.mxu0 0
    %578 = vmatpush.bf16.xpose.msra.mxu0 %v569
    %579 = vmatmul.bf16.gmra.mxu0 %v566
    %v580 = vpop.f32.mrf.mxu0
    %v581 = vadd.f32 0.0, %v580
    %v582 = vpop.f32.mrf.mxu0
    %583 = vdwg.mxu0
    %v584 = vmul.f32 %v581, 0.35355338
    %v585 = vadd.f32 %v584, %v419
    %v586 = vsel %vm131, %v585, -inf
    %587 = vmax.xlane.f32.xlu0 %v586
    %v588 = vpop.xlane.xlu0 %587
    %v589 = vsub.f32 %v585, %v588
    %v590 = vmul.f32 %v589, 1.442695
    %v591 = vpow.pop %v590
    %v592 = vsel %vm131, %v591, 0.0
    %593 = vadd.xlane.f32.xlu0 %v592
    %v594 = vpop.xlane.xlu0 %593
    %v595 = vrcp.pop %v594
    %v596 = vmul.f32 %v594, %v595
    %v597 = vsub.f32 1.0, %v596
    %v598 = vmul.f32 %v595, %v597
    %v599 = vadd.f32 %v595, %v598
    %vm600 = vweird.f32 %v594
    %vm601 = vweird.f32 %v595
    %vm602 = vmor %vm600, %vm601
    %v603 = vsel %vm602, %v595, %v599
    %v604 = vand.u32 2147483647, %v594
    %vm605 = vcmp.eq.f32.partialorder %v604, 8.507059e+37
    %v606 = vand.u32 %v594, 2147483648
    %v607 = vor.u32 1.1754944e-38, %v606
    %v608 = vsel %vm605, %v607, %v603
    %v609 = vmul.f32 1.0, %v608
    %v610 = vmul.f32 %v591, %v609
    %v611 = vpack.c.bf16 %v610, %v610
    %612 = vrot.lane.b32.xlu0 %v421, 72
    %v613 = vpop.permute.xlu0 %612
    %v615 = vsel %vm131, %v611, 0
    %v618 = vsel %vm184, %v613, 0
    %620 = vmatpush.bf16.msra.mxu0 0
    %621 = vmatpush.bf16.msra.mxu0 0
    %622 = vmatpush.bf16.msra.mxu0 0
    %623 = vmatpush.bf16.msra.mxu0 0
    %624 = vmatpush.bf16.msra.mxu0 0
    %625 = vmatpush.bf16.msra.mxu0 0
    %626 = vmatpush.bf16.msra.mxu0 0
    %627 = vmatpush.bf16.msra.mxu0 %v618
    %628 = vmatmul.bf16.gmra.mxu0 %v615
    %v629 = vpop.f32.mrf.mxu0
    %v630 = vadd.f32 0.0, %v629
    %v631 = vpop.f32.mrf.mxu0
    %632 = vdwg.mxu0
    %634 = vrot.lane.b32.xlu0 %v630, 16
    %v635 = vpop.permute.xlu0 %634
    %637 = vst.msk [vmem:[#allocation2 + $0x8] sm:$0xff] %vm346, %v635
    %638 = vrot.lane.b32.xlu0 %v421, 104
    %v639 = vpop.permute.xlu0 %638
    %v641 = vsel %vm131, %v639, 0
    %643 = vmatpush.bf16.xpose.msra.mxu0 0
    %644 = vmatpush.bf16.xpose.msra.mxu0 0
    %645 = vmatpush.bf16.xpose.msra.mxu0 0
    %646 = vmatpush.bf16.xpose.msra.mxu0 0
    %647 = vmatpush.bf16.xpose.msra.mxu0 0
    %648 = vmatpush.bf16.xpose.msra.mxu0 0
    %649 = vmatpush.bf16.xpose.msra.mxu0 0
    %650 = vmatpush.bf16.xpose.msra.mxu0 %v569
    %651 = vmatmul.bf16.gmra.mxu0 %v641
    %v652 = vpop.f32.mrf.mxu0
    %v653 = vadd.f32 0.0, %v652
    %v654 = vpop.f32.mrf.mxu0
    %655 = vdwg.mxu0
    %v656 = vmul.f32 %v653, 0.35355338
    %v657 = vadd.f32 %v656, %v419
    %v658 = vsel %vm131, %v657, -inf
    %659 = vmax.xlane.f32.xlu0 %v658
    %v660 = vpop.xlane.xlu0 %659
    %v661 = vsub.f32 %v657, %v660
    %v662 = vmul.f32 %v661, 1.442695
    %v663 = vpow.pop %v662
    %v664 = vsel %vm131, %v663, 0.0
    %665 = vadd.xlane.f32.xlu0 %v664
    %v666 = vpop.xlane.xlu0 %665
    %v667 = vrcp.pop %v666
    %v668 = vmul.f32 %v666, %v667
    %v669 = vsub.f32 1.0, %v668
    %v670 = vmul.f32 %v667, %v669
    %v671 = vadd.f32 %v667, %v670
    %vm672 = vweird.f32 %v666
    %vm673 = vweird.f32 %v667
    %vm674 = vmor %vm672, %vm673
    %v675 = vsel %vm674, %v667, %v671
    %v676 = vand.u32 2147483647, %v666
    %vm677 = vcmp.eq.f32.partialorder %v676, 8.507059e+37
    %v678 = vand.u32 %v666, 2147483648
    %v679 = vor.u32 1.1754944e-38, %v678
    %v680 = vsel %vm677, %v679, %v675
    %v681 = vmul.f32 1.0, %v680
    %v682 = vmul.f32 %v663, %v681
    %v683 = vpack.c.bf16 %v682, %v682
    %v685 = vsel %vm131, %v683, 0
    %687 = vmatpush.bf16.msra.mxu0 0
    %688 = vmatpush.bf16.msra.mxu0 0
    %689 = vmatpush.bf16.msra.mxu0 0
    %690 = vmatpush.bf16.msra.mxu0 0
    %691 = vmatpush.bf16.msra.mxu0 0
    %692 = vmatpush.bf16.msra.mxu0 0
    %693 = vmatpush.bf16.msra.mxu0 0
    %694 = vmatpush.bf16.msra.mxu0 %v618
    %695 = vmatmul.bf16.gmra.mxu0 %v685
    %v696 = vpop.f32.mrf.mxu0
    %v697 = vadd.f32 0.0, %v696
    %v698 = vpop.f32.mrf.mxu0
    %699 = vdwg.mxu0
    %701 = vrot.lane.b32.xlu0 %v697, 24
    %v702 = vpop.permute.xlu0 %701
    %704 = vst.msk [vmem:[#allocation2 + $0x8] sm:$0xff] %vm414, %v702
    %v705 = vld [vmem:[#allocation2] sm:$0xff]
    %v706 = vld [vmem:[#allocation2 + $0x8] sm:$0xff]
    %v707 = vpack.c.bf16 %v706, %v705
    %v708 = vld [vmem:[#allocation9] sm:$0xf]
    %v709 = vld [vmem:[#allocation9 + $0x4] sm:$0xf]
    %v710 = vld [vmem:[#allocation9 + $0x8] sm:$0xf]
    %v711 = vld [vmem:[#allocation9 + $0xc] sm:$0xf]
    %v716 = vunpack.c.l.b16 %v708
    %v717 = vunpack.c.l.b16 %v709
    %v718 = vunpack.c.l.b16 %v710
    %v719 = vunpack.c.l.b16 %v711
    %v720 = vpack.c.b16 %v717, %v716
    %v721 = vpack.c.b16 %v719, %v718
    %v725 = vsel %vm105, %v707, 0
    %727 = vmatpush.bf16.msra.mxu0 0
    %728 = vmatpush.bf16.msra.mxu0 0
    %729 = vmatpush.bf16.msra.mxu0 0
    %730 = vmatpush.bf16.msra.mxu0 0
    %731 = vmatpush.bf16.msra.mxu0 0
    %732 = vmatpush.bf16.msra.mxu0 0
    %733 = vmatpush.bf16.msra.mxu0 %v721
    %734 = vmatpush.bf16.msra.mxu0 %v720
    %735 = vmatmul.bf16.gmra.mxu0 %v725
    %v736 = vpop.f32.mrf.mxu0
    %v737 = vadd.f32 0.0, %v736
    %v738 = vpop.f32.mrf.mxu0
    %v739 = vadd.f32 0.0, %v738
    %740 = vdwg.mxu0
    %741 = vst [vmem:[#allocation11] sm:$0xff] %v737
    %742 = vst [vmem:[#allocation11 + $0x8] sm:$0xff] %v739
    // Predicated region
    $region34: #{tpu_custom_call.1} parent=1 // pred_check
      _
    $region35: #{tpu_custom_call.1} parent=1 // pred_check_branch
      %744 = sbr.rel (0) target = $region37
    $region36: #{tpu_custom_call.1} parent=1 // pred_region
      %746 = vsyncadd [#allocation5], 0
      %s747 = sshll.u32 [#allocation11], 4
      %s748 = int_to_ptr.vmem [resolvable:$true] %s747
      %s749 = sshll.u32 %s4, 4
      %s750 = int_to_ptr.hbm [resolvable:$true] %s749
      %755 = dma.vmem_to_hbm [thread:$0]  %s748, 256, %s750, [#allocation5], 128, 128, 8
    $region37: #{tpu_custom_call.1} parent=1 // pred_fallthru
      _
    // Predicated region
    $region38: #{tpu_custom_call.1} parent=1 // pred_check
      _
    $region39: #{tpu_custom_call.1} parent=1 // pred_check_branch
      %757 = sbr.rel (0) target = $region41
    $region40: #{tpu_custom_call.1} parent=1 // pred_region
      %759 = dma.done [#allocation5], 256
    $region41: #{tpu_custom_call.1} parent=1 // pred_fallthru
      _
    %760 = vsyncpa [#allocation4], 1
    %761 = vsyncpa [#allocation7], 1
    %762 = vsyncpa [#allocation10], 1
    %763 = vsyncpa [#allocation5], 1

</llo_original>
